<compile_context>
chip_gen: v7x
topology: tpu7x:2x2x1
jax: 0.10.0
libtpu: 0.0.40
codegen_flags: <defaults>
</compile_context>

<pallas_src>
import functools

import jax
import jax.numpy as jnp
from jax.experimental import pallas as pl
from jax.experimental.pallas import tpu as pltpu


def _infonce_kernel(v_ref, y_ref, o_ref, *, inv_temperature, row_tile, n_valid):
    v = v_ref[...].astype(jnp.float32)
    y = y_ref[...].astype(jnp.float32)

    # F.normalize(v, dim=-1) followed by /temperature, folded into a single
    # per-row scale: v * rsqrt(max(||v||^2, eps^2)) * (1/temperature).
    sum_sq = jnp.sum(v * v, axis=-1, keepdims=True)
    scale = jax.lax.rsqrt(jnp.maximum(sum_sq, 1e-24)) * inv_temperature
    x = v * scale

    # softmax + log done in log-space (never materialize p = e / sum_e):
    #   log p      = (x - m) - log(sum_e)
    #   log(1 - p) = log(sum_e - e) - log(sum_e)
    m = jnp.max(x, axis=-1, keepdims=True)
    xm = x - m
    e = jnp.exp(xm)
    sum_e = jnp.sum(e, axis=-1, keepdims=True)
    log_sum_e = jnp.log(sum_e)
    logp = xm - log_sum_e
    log1mp = jnp.log(jnp.maximum(sum_e - e, 0.0)) - log_sum_e

    # PyTorch binary_cross_entropy clamps the log terms at -100.
    logp = jnp.maximum(logp, -100.0)
    log1mp = jnp.maximum(log1mp, -100.0)

    # loss = -(y*logp + (1-y)*log1mp), folded to drop one full-width mul+sub.
    loss = -(log1mp + y * (logp - log1mp))

    # Per-block sublane reduction on the otherwise-idle MXU.  The reduce
    # vector doubles as a row-validity mask so zero-padded rows contribute
    # exactly zero (no extra VALU work).
    row0 = pl.program_id(0) * row_tile
    row_ids = row0 + jax.lax.broadcasted_iota(jnp.int32, (1, row_tile), 1)
    r = (row_ids < n_valid).astype(jnp.float32)
    o_ref[0] = jnp.dot(r, loss, preferred_element_type=jnp.float32)


def _vmem_limit_bytes():
    """Generation-aware scoped-VMEM limit (v5e/v6e: 128 MiB phys, v7x: 64 MiB)."""
    try:
        cap = int(pltpu.get_tpu_info().vmem_capacity_bytes)
    except Exception:
        cap = 64 << 20  # conservative: assume v7x-sized VMEM
    return min(48 << 20, cap // 2)


def _choose_row_tile(B, C, v_itemsize, y_itemsize, budget_bytes, max_tile=512):
    """Largest row tile whose *real* VMEM footprint fits the budget.

    Footprint per row: 2 pipeline buffers per input stream plus ~6 full-width
    f32 temporaries inside the kernel (f32 upcasts, x, e, logp, log1mp, loss).
    Also caps at B//2 (when possible) so the parallel grid axis has >= 2
    blocks to shard across v7x's two TensorCores.
    """
    bytes_per_row = C * (2 * (v_itemsize + y_itemsize) + 6 * 4)
    cap = max(8, budget_bytes // max(1, bytes_per_row))
    cap = min(cap, max_tile, B)
    if B >= 16:
        cap = min(cap, B // 2)
    t = max(8, (cap // 8) * 8)
    while t > 8 and B % t != 0:
        t -= 8
    return t


def info_nce(values, labels, temperature=0.01, *, row_tile=None,
             compact_labels=True):
    B, C = values.shape
    assert labels.shape == (B, C)
    n_valid = B

    # Halve label HBM traffic (kernel upcasts to f32 internally; BCE targets
    # tolerate bf16).  Callers may also pass bf16 `values` themselves.
    if compact_labels and labels.dtype == jnp.float32:
        labels = labels.astype(jnp.bfloat16)

    # Pad B up to a multiple of 8 so the (8,128)-aligned, double-buffered
    # tiled path is always used; padded rows are masked out in-kernel.
    pad = (-B) % 8
    if pad:
        values = jnp.pad(values, ((0, pad), (0, 0)))
        labels = jnp.pad(labels, ((0, pad), (0, 0)))
        B = B + pad

    vmem_limit = _vmem_limit_bytes()
    if row_tile is None:
        row_tile = _choose_row_tile(
            B, C,
            jnp.dtype(values.dtype).itemsize,
            jnp.dtype(labels.dtype).itemsize,
            budget_bytes=(vmem_limit * 3) // 4,  # headroom for Mosaic scratch
        )
    assert B % row_tile == 0, "padded batch must be divisible by row_tile"
    num_blocks = B // row_tile

    kernel = functools.partial(
        _infonce_kernel,
        inv_temperature=1.0 / float(temperature),
        row_tile=row_tile,
        n_valid=n_valid,
    )

    # TODO(synk): column-tiled path for very large C.  A single online pass
    # cannot finalize log(1 - p) (it needs the full-row sum_e for every
    # element), so this requires a two-pass (max/sum then loss) column grid.
    partials = pl.pallas_call(
        kernel,
        out_shape=jax.ShapeDtypeStruct((num_blocks, 1, C), jnp.float32),
        grid_spec=pltpu.PrefetchScalarGridSpec(
            num_scalar_prefetch=0,
            grid=(num_blocks,),
            in_specs=[
                pl.BlockSpec((row_tile, C), lambda i: (i, 0)),
                pl.BlockSpec((row_tile, C), lambda i: (i, 0)),
            ],
            out_specs=pl.BlockSpec((1, 1, C), lambda i: (i, 0, 0)),
        ),
        compiler_params=pltpu.CompilerParams(
            dimension_semantics=("parallel",),
            vmem_limit_bytes=vmem_limit,
        ),
    )(values, labels)

    # Final tiny reduce + mean in the wrapper (padded rows already excluded).
    return jnp.sum(partials) / float(n_valid * C)


def info_nce_ref(values, labels, temperature=0.01):
    """Plain-JAX reference mirroring the PyTorch module."""
    v = values.astype(jnp.float32)
    y = labels.astype(jnp.float32)
    norm = jnp.sqrt(jnp.sum(v * v, axis=-1, keepdims=True))
    x = v / jnp.maximum(norm, 1e-12)
    x = x / temperature
    p = jax.nn.softmax(x, axis=-1)
    logp = jnp.maximum(jnp.log(p), -100.0)
    log1mp = jnp.maximum(jnp.log(1.0 - p), -100.0)
    return jnp.mean(-(y * logp + (1.0 - y) * log1mp))


if __name__ == "__main__":
    key = jax.random.PRNGKey(0)
    kv, kl, kv2, kl2 = jax.random.split(key, 4)

    B, C = 64, 128  # small, TPU-tile-friendly shapes
    values = jax.random.normal(kv, (B, C), dtype=jnp.float32)
    labels = jax.random.uniform(kl, (B, C), dtype=jnp.float32)  # BCE targets in [0, 1]

    ref = info_nce_ref(values, labels, temperature=0.01)
    ref_bf16y = info_nce_ref(
        values, labels.astype(jnp.bfloat16).astype(jnp.float32), temperature=0.01)

    # Tolerance note: the kernel computes log(1-p) in log-space, which is
    # *more* accurate than the reference's f32 (1 - p) path when p saturates,
    # so strict bit-parity is not expected.
    tol = dict(rtol=1e-3, atol=1e-3)

    # Exact-dtype path (no label compaction), fixed multi-block tiling.
    loss_exact = jax.block_until_ready(
        info_nce(values, labels, temperature=0.01, row_tile=16,
                 compact_labels=False))
    assert jnp.allclose(loss_exact, ref, **tol), (loss_exact, ref)

    # Default path: bf16 labels + auto row tile (>= 2 blocks for megacore).
    loss = jax.block_until_ready(info_nce(values, labels, temperature=0.01))
    assert jnp.allclose(loss, ref_bf16y, **tol), (loss, ref_bf16y)

    # Odd batch: exercises wrapper-side padding + in-kernel row masking.
    B2 = 37
    v2 = jax.random.normal(kv2, (B2, C), dtype=jnp.float32)
    y2 = jax.random.uniform(kl2, (B2, C), dtype=jnp.float32)
    ref2 = info_nce_ref(v2, y2.astype(jnp.bfloat16).astype(jnp.float32),
                        temperature=0.01)
    loss2 = jax.block_until_ready(info_nce(v2, y2, temperature=0.01))
    assert jnp.allclose(loss2, ref2, **tol), (loss2, ref2)

    print("KERNEL_OK")
</pallas_src>

<mosaic_0001>
module attributes {stable_mosaic.version = 11 : i64} {
  func.func @_infonce_kernel(%arg0: i32, %arg1: memref<16x128xf32, #tpu.memory_space<vmem>>, %arg2: memref<16x128xf32, #tpu.memory_space<vmem>>, %arg3: memref<1x1x128xf32, #tpu.memory_space<vmem>>) attributes {dimension_semantics = [#tpu.dimension_semantics<parallel>], iteration_bounds = array<i64: 4>, scalar_prefetch = 0 : i64, scratch_operands = 0 : i64, tpu.core_type = #tpu.core_type<tc>, window_params = [{transform_indices = @transform_0, window_bounds = array<i64: 16, 128>}, {transform_indices = @transform_1, window_bounds = array<i64: 16, 128>}, {transform_indices = @transform_2, window_bounds = array<i64: 1, 1, 128>}]} {
    %c0 = arith.constant 0 : index
    %c0_0 = arith.constant 0 : index
    %0 = vector.load %arg1[%c0, %c0_0] : memref<16x128xf32, #tpu.memory_space<vmem>>, vector<16x128xf32>
    %c0_1 = arith.constant 0 : index
    %c0_2 = arith.constant 0 : index
    %1 = vector.load %arg2[%c0_1, %c0_2] : memref<16x128xf32, #tpu.memory_space<vmem>>, vector<16x128xf32>
    %2 = arith.mulf %0, %0 : vector<16x128xf32>
    %cst = arith.constant dense<0.000000e+00> : vector<16xf32>
    %3 = vector.multi_reduction <add>, %2, %cst [1] : vector<16x128xf32> to vector<16xf32>
    %4 = vector.shape_cast %3 : vector<16xf32> to vector<16x1xf32>
    %cst_3 = arith.constant 1.000000e-24 : f32
    %5 = vector.broadcast %cst_3 : f32 to vector<16x1xf32>
    %6 = arith.maximumf %4, %5 : vector<16x1xf32>
    %7 = math.rsqrt %6 : vector<16x1xf32>
    %cst_4 = arith.constant 1.000000e+02 : f32
    %8 = vector.broadcast %cst_4 : f32 to vector<16x1xf32>
    %9 = arith.mulf %7, %8 : vector<16x1xf32>
    %10 = vector.broadcast %9 : vector<16x1xf32> to vector<16x128xf32>
    %11 = arith.mulf %0, %10 : vector<16x128xf32>
    %cst_5 = arith.constant dense<0xFF800000> : vector<16xf32>
    %12 = vector.multi_reduction <maximumf>, %11, %cst_5 [1] : vector<16x128xf32> to vector<16xf32>
    %13 = vector.shape_cast %12 : vector<16xf32> to vector<16x1xf32>
    %14 = vector.broadcast %13 : vector<16x1xf32> to vector<16x128xf32>
    %15 = arith.subf %11, %14 : vector<16x128xf32>
    %16 = math.exp %15 : vector<16x128xf32>
    %cst_6 = arith.constant dense<0.000000e+00> : vector<16xf32>
    %17 = vector.multi_reduction <add>, %16, %cst_6 [1] : vector<16x128xf32> to vector<16xf32>
    %18 = vector.shape_cast %17 : vector<16xf32> to vector<16x1xf32>
    %19 = math.log %18 : vector<16x1xf32>
    %20 = vector.broadcast %19 : vector<16x1xf32> to vector<16x128xf32>
    %21 = arith.subf %15, %20 : vector<16x128xf32>
    %22 = vector.broadcast %18 : vector<16x1xf32> to vector<16x128xf32>
    %23 = arith.subf %22, %16 : vector<16x128xf32>
    %cst_7 = arith.constant 0.000000e+00 : f32
    %24 = vector.broadcast %cst_7 : f32 to vector<16x128xf32>
    %25 = arith.maximumf %23, %24 : vector<16x128xf32>
    %26 = math.log %25 : vector<16x128xf32>
    %27 = vector.broadcast %19 : vector<16x1xf32> to vector<16x128xf32>
    %28 = arith.subf %26, %27 : vector<16x128xf32>
    %cst_8 = arith.constant -1.000000e+02 : f32
    %29 = vector.broadcast %cst_8 : f32 to vector<16x128xf32>
    %30 = arith.maximumf %21, %29 : vector<16x128xf32>
    %cst_9 = arith.constant -1.000000e+02 : f32
    %31 = vector.broadcast %cst_9 : f32 to vector<16x128xf32>
    %32 = arith.maximumf %28, %31 : vector<16x128xf32>
    %33 = arith.subf %30, %32 : vector<16x128xf32>
    %34 = arith.mulf %1, %33 : vector<16x128xf32>
    %35 = arith.addf %32, %34 : vector<16x128xf32>
    %cst_10 = arith.constant 0.000000e+00 : f32
    %36 = vector.broadcast %cst_10 : f32 to vector<16x128xf32>
    %37 = arith.subf %36, %35 : vector<16x128xf32>
    %c16_i32 = arith.constant 16 : i32
    %38 = arith.muli %arg0, %c16_i32 : i32
    %39 = tpu.iota {dimensions = array<i32: 1>} : vector<1x16xi32>
    %40 = vector.broadcast %38 : i32 to vector<1x16xi32>
    %41 = arith.addi %40, %39 : vector<1x16xi32>
    %c64_i32 = arith.constant 64 : i32
    %42 = vector.broadcast %c64_i32 : i32 to vector<1x16xi32>
    %43 = arith.cmpi slt, %41, %42 : vector<1x16xi32>
    %44 = arith.extui %43 : vector<1x16xi1> to vector<1x16xi32>
    %45 = arith.sitofp %44 : vector<1x16xi32> to vector<1x16xf32>
    %cst_11 = arith.constant dense<0.000000e+00> : vector<1x128xf32>
    %46 = tpu.matmul %45, %37, %cst_11 {dimension_numbers = #tpu.dot_dimension_numbers<[1], [0], [0], [1], [0, 0, 1, 1], [], []>} : vector<1x16xf32>, vector<16x128xf32>, vector<1x128xf32> -> vector<1x128xf32>
    %c0_12 = arith.constant 0 : index
    %c0_13 = arith.constant 0 : index
    %c0_14 = arith.constant 0 : index
    %47 = vector.load %arg3[%c0_12, %c0_13, %c0_14] : memref<1x1x128xf32, #tpu.memory_space<vmem>>, vector<1x1x128xf32>
    %48 = vector.shape_cast %47 : vector<1x1x128xf32> to vector<1x128xf32>
    %49 = vector.shape_cast %46 : vector<1x128xf32> to vector<1x1x128xf32>
    tpu.vector_store %arg3[%c0_12, %c0_13, %c0_14], %49 {strides = array<i32>} : memref<1x1x128xf32, #tpu.memory_space<vmem>>, vector<1x1x128xf32>,
    return
  }
  func.func @transform_0(%arg0: i32) -> (i32, i32) {
    %c0_i32 = arith.constant 0 : i32
    %c0_i32_0 = arith.constant 0 : i32
    return %arg0, %c0_i32 : i32, i32
  }
  func.func @transform_1(%arg0: i32) -> (i32, i32) {
    %c0_i32 = arith.constant 0 : i32
    %c0_i32_0 = arith.constant 0 : i32
    return %arg0, %c0_i32 : i32, i32
  }
  func.func @transform_2(%arg0: i32) -> (i32, i32, i32) {
    %c0_i32 = arith.constant 0 : i32
    %c0_i32_0 = arith.constant 0 : i32
    %c0_i32_1 = arith.constant 0 : i32
    return %arg0, %c0_i32, %c0_i32_0 : i32, i32, i32
  }
}

</mosaic_0001>

<llo_original>
// kernel: tpu_custom_call.1
$region0: #{tpu_custom_call.1}
  #allocation0 [shape = 'u32[]', space=smem, size = 0x4, offset = 0x4, fixed_abs, tag = 'smem constant byte address 0x4 - core index']
  #allocation1 [shape = 'u32[144,128]{1,0:T(1,128)}', space=vmem, size = 0x12000, scoped, tag = 'internal scratch']
  %s0 = inlined_call_operand.hbm [shape: f32[64,128], index: 0, kind: input, shape index: {}]
  %s1 = inlined_call_operand.hbm [shape: f32[64,128], index: 1, kind: input, shape index: {}]
  %s2 = inlined_call_operand.hbm [shape: f32[4,1,128], index: 2, kind: output, shape index: {}]
  %s3 = sld [smem:[#allocation0]]
  $region49: #{tpu_custom_call.1} parent=0
    _
  %s5 = ssub.s32 1, %s3
  %s6 = scalar_select 0, %s5, %s3
  $region1: #{tpu_custom_call.1} parent=0
    #allocation2 [shape = 'u8[16384]{0}', space=vmem, size = 0x4000, scoped, tag = 'input window, operand 0']
    #allocation3 [shape = 's32[2]{0}', space=sflag, size = 0x8, scoped, tag = 'scoped memory for tpu_custom_call.1']
    #allocation4 [shape = 's32[2]{0}', space=sflag, size = 0x8, scoped, tag = 'scoped memory for tpu_custom_call.1']
    #allocation5 [shape = 'u8[16384]{0}', space=vmem, size = 0x4000, scoped, tag = 'input window, operand 1']
    #allocation6 [shape = 's32[2]{0}', space=sflag, size = 0x8, scoped, tag = 'scoped memory for tpu_custom_call.1']
    #allocation7 [shape = 'u8[1024]{0}', space=vmem, size = 0x400, scoped, tag = 'output window, operand 0']
    %7 = vsyncpa [#allocation3], 0
    %s8 = scalar_lea.sflag [#allocation3], 1
    %9 = vsyncpa %s8, 0
    %10 = vsyncpa [#allocation6], 0
    %s11 = scalar_lea.sflag [#allocation6], 1
    %12 = vsyncpa %s11, 0
    %13 = vsyncpa [#allocation4], 0
    %s14 = scalar_lea.sflag [#allocation4], 1
    %15 = vsyncpa %s14, 0
    loop: start=0, step=1, limit=6
    $region2: #{tpu_custom_call.1} parent=1 // loop_pre_header
      _
    $region3: #{tpu_custom_call.1} parent=1 // loop_header
      %s17 = sphi 0, %s21
      %p18 = scmp.ge.s32.totalorder %s17, 6
      %s27 = sphi 0, %s29
      %s30 = sphi 0, %s27
      %s31 = sphi 0, %s30
      %s47 = sphi 0, %s31
      %s53 = sphi 0, %s55
      %s56 = sphi 0, %s53
      %s57 = sphi 0, %s56
      %s73 = sphi 0, %s57
      %s79 = sphi 0, %s81
      %s82 = sphi 0, %s79
      %s83 = sphi 0, %s82
      %s99 = sphi 0, %s83
    $region4: #{tpu_custom_call.1} parent=1 // loop_header_branch
      %20 = sbr.rel (%p18) target = $region8
    $region5: #{tpu_custom_call.1} parent=1 // loop_body
      %s22 = ssub.s32 %s17, 1
      %s23 = ssub.s32 %s17, 2
      %s24 = sadd.s32 %s17, 1
      %s25 = ssub.s32 %s17, %s24
      %p26 = scmp.eq.s32.totalorder %s25, 0
      %s28 = sadd.s32 %s27, 1
      %s29 = scalar_select %p26, %s27, %s28
      %p32 = pneg %p26
      %p33 = scmp.eq.s32.totalorder %s17, 3
      %p34 = por %p32, %p33
      %p35 = scmp.ne.s32.totalorder %s27, %s30
      %p36 = scmp.eq.s32.totalorder %s17, 0
      %p37 = por %p35, %p36
      %p38 = scmp.ne.s32.totalorder %s27, %s30
      %p39 = scmp.eq.s32.totalorder %s22, 3
      %p40 = por %p38, %p39
      %p41 = scmp.ne.s32.totalorder %s30, %s31
      %p42 = scmp.eq.s32.totalorder %s22, 0
      %p43 = por %p41, %p42
      %p44 = scmp.ne.s32.totalorder %s30, %s31
      %p45 = scmp.eq.s32.totalorder %s23, 3
      %p46 = por %p44, %p45
      %p48 = scmp.ne.s32.totalorder %s31, %s47
      %p49 = scmp.eq.s32.totalorder %s23, 0
      %p50 = por %p48, %p49
      %s51 = ssub.s32 %s17, %s24
      %p52 = scmp.eq.s32.totalorder %s51, 0
      %s54 = sadd.s32 %s53, 1
      %s55 = scalar_select %p52, %s53, %s54
      %p58 = pneg %p52
      %p59 = scmp.eq.s32.totalorder %s17, 3
      %p60 = por %p58, %p59
      %p61 = scmp.ne.s32.totalorder %s53, %s56
      %p62 = scmp.eq.s32.totalorder %s17, 0
      %p63 = por %p61, %p62
      %p64 = scmp.ne.s32.totalorder %s53, %s56
      %p65 = scmp.eq.s32.totalorder %s22, 3
      %p66 = por %p64, %p65
      %p67 = scmp.ne.s32.totalorder %s56, %s57
      %p68 = scmp.eq.s32.totalorder %s22, 0
      %p69 = por %p67, %p68
      %p70 = scmp.ne.s32.totalorder %s56, %s57
      %p71 = scmp.eq.s32.totalorder %s23, 3
      %p72 = por %p70, %p71
      %p74 = scmp.ne.s32.totalorder %s57, %s73
      %p75 = scmp.eq.s32.totalorder %s23, 0
      %p76 = por %p74, %p75
      %s77 = ssub.s32 %s17, %s24
      %p78 = scmp.eq.s32.totalorder %s77, 0
      %s80 = sadd.s32 %s79, 1
      %s81 = scalar_select %p78, %s79, %s80
      %p84 = pneg %p78
      %p85 = scmp.eq.s32.totalorder %s17, 3
      %p86 = por %p84, %p85
      %p87 = scmp.ne.s32.totalorder %s79, %s82
      %p88 = scmp.eq.s32.totalorder %s17, 0
      %p89 = por %p87, %p88
      %p90 = scmp.ne.s32.totalorder %s79, %s82
      %p91 = scmp.eq.s32.totalorder %s22, 3
      %p92 = por %p90, %p91
      %p93 = scmp.ne.s32.totalorder %s82, %s83
      %p94 = scmp.eq.s32.totalorder %s22, 0
      %p95 = por %p93, %p94
      %p96 = scmp.ne.s32.totalorder %s82, %s83
      %p97 = scmp.eq.s32.totalorder %s23, 3
      %p98 = por %p96, %p97
      %p100 = scmp.ne.s32.totalorder %s83, %s99
      %p101 = scmp.eq.s32.totalorder %s23, 0
      %p102 = por %p100, %p101
      %p103 = scmp.le.s32.totalorder 1, %s17
      %p104 = scmp.lt.s32.totalorder %s17, 5
      %p105 = pnand %p103, %p104
      %p106 = pneg %p105
      // Predicated region
      $region9: #{tpu_custom_call.1} parent=5 // pred_check
        _
      $region10: #{tpu_custom_call.1} parent=5 // pred_check_branch
        %108 = sbr.rel (%p105) target = $region12
      $region11: #{tpu_custom_call.1} parent=5 // pred_region
        %s109 = ssub.s32 %s17, 1
      $region12: #{tpu_custom_call.1} parent=5 // pred_fallthru
        _
      %p110 = scmp.lt.s32.totalorder %s17, 4
      // Predicated region
      $region13: #{tpu_custom_call.1} parent=5 // pred_check
        %p111 = pneg %p110
      $region14: #{tpu_custom_call.1} parent=5 // pred_check_branch
        %113 = sbr.rel (%p111) target = $region16
      $region15: #{tpu_custom_call.1} parent=5 // pred_region
        // Predicated region
        $region17: #{tpu_custom_call.1} parent=15 // pred_check
          %p114 = pneg %p37
        $region18: #{tpu_custom_call.1} parent=15 // pred_check_branch
          %116 = sbr.rel (%p114) target = $region20
        $region19: #{tpu_custom_call.1} parent=15 // pred_region
          %s117 = sand.u32 %s27, 1
          %s118 = scalar_lea.sflag [#allocation3], %s117
          %s119 = sand.u32 %s27, 1
          %s120 = smul.addr %s119, 16
          %s121 = scalar_lea.vmem [#allocation2], %s120
          %s122 = smul.u32 2, %s17
          %s124 = ssub.s32 256, 256
          %125 = vsyncadd %s118, %s124
          %s126 = smul.addr %s122, 128
          %s127 = scalar_lea.hbm %s0, %s126
          %s128 = sshll.u32 %s121, 4
          %s129 = int_to_ptr.vmem [resolvable:$true] %s128
          %134 = dma.hbm_to_vmem [thread:$0]  %s127, 256, %s129, %s118, 128, 128, 8
        $region20: #{tpu_custom_call.1} parent=15 // pred_fallthru
          _
        // Predicated region
        $region21: #{tpu_custom_call.1} parent=15 // pred_check
          %p135 = pneg %p63
        $region22: #{tpu_custom_call.1} parent=15 // pred_check_branch
          %137 = sbr.rel (%p135) target = $region24
        $region23: #{tpu_custom_call.1} parent=15 // pred_region
          %s138 = sand.u32 %s53, 1
          %s139 = scalar_lea.sflag [#allocation6], %s138
          %s140 = sand.u32 %s53, 1
          %s141 = smul.addr %s140, 16
          %s142 = scalar_lea.vmem [#allocation5], %s141
          %s143 = smul.u32 2, %s17
          %s145 = ssub.s32 256, 256
          %146 = vsyncadd %s139, %s145
          %s147 = smul.addr %s143, 128
          %s148 = scalar_lea.hbm %s1, %s147
          %s149 = sshll.u32 %s142, 4
          %s150 = int_to_ptr.vmem [resolvable:$true] %s149
          %155 = dma.hbm_to_vmem [thread:$0]  %s148, 256, %s150, %s139, 128, 128, 8
        $region24: #{tpu_custom_call.1} parent=15 // pred_fallthru
          _
      $region16: #{tpu_custom_call.1} parent=5 // pred_fallthru
        _
      %p156 = scmp.le.s32.totalorder 1, %s17
      %p157 = scmp.lt.s32.totalorder %s17, 5
      %p158 = pnand %p156, %p157
      %p159 = pneg %p158
      // Predicated region
      $region25: #{tpu_custom_call.1} parent=5 // pred_check
        _
      $region26: #{tpu_custom_call.1} parent=5 // pred_check_branch
        %161 = sbr.rel (%p158) target = $region28
      $region27: #{tpu_custom_call.1} parent=5 // pred_region
        %s162 = ssub.s32 %s17, 1
        %s163 = sand.u32 %s30, 1
        %s164 = scalar_lea.sflag [#allocation3], %s163
        %s165 = sand.u32 %s30, 1
        %s166 = smul.addr %s165, 16
        %s167 = scalar_lea.vmem [#allocation2], %s166
        // Predicated region
        $region29: #{tpu_custom_call.1} parent=27 // pred_check
          %p168 = pneg %p43
        $region30: #{tpu_custom_call.1} parent=27 // pred_check_branch
          %170 = sbr.rel (%p168) target = $region32
        $region31: #{tpu_custom_call.1} parent=27 // pred_region
          %171 = dma.done %s164, 256
        $region32: #{tpu_custom_call.1} parent=27 // pred_fallthru
          _
        %s172 = sand.u32 %s56, 1
        %s173 = scalar_lea.sflag [#allocation6], %s172
        %s174 = sand.u32 %s56, 1
        %s175 = smul.addr %s174, 16
        %s176 = scalar_lea.vmem [#allocation5], %s175
        // Predicated region
        $region33: #{tpu_custom_call.1} parent=27 // pred_check
          %p177 = pneg %p69
        $region34: #{tpu_custom_call.1} parent=27 // pred_check_branch
          %179 = sbr.rel (%p177) target = $region36
        $region35: #{tpu_custom_call.1} parent=27 // pred_region
          %180 = dma.done %s173, 256
        $region36: #{tpu_custom_call.1} parent=27 // pred_fallthru
          _
        %s181 = sand.u32 %s30, 1
        %s182 = scalar_lea.sflag [#allocation3], %s181
        %s183 = sand.u32 %s30, 1
        %s184 = smul.addr %s183, 16
        %s185 = scalar_lea.vmem [#allocation2], %s184
        %p186 = pneg %p43
        %p187 = pneg %p40
        %s188 = sand.u32 %s56, 1
        %s189 = scalar_lea.sflag [#allocation6], %s188
        %s190 = sand.u32 %s56, 1
        %s191 = smul.addr %s190, 16
        %s192 = scalar_lea.vmem [#allocation5], %s191
        %p193 = pneg %p69
        %p194 = pneg %p66
        %p195 = pneg %p95
        %p196 = pneg %p92
        %s197 = sand.u32 %s82, 1
        %s198 = scalar_lea.sflag [#allocation4], %s197
        %s199 = sand.u32 %s82, 1
        %s200 = scalar_lea.vmem [#allocation7], %s199
        %s201 = smul.u32 2, %s22
        %s202 = smul.u32 2, %s22
        %v203 = vld [vmem:[%s167] sm:$0xff]
        %v204 = vld [vmem:[%s167 + $0x8] sm:$0xff]
        %v205 = vld [vmem:[%s176] sm:$0xff]
        %v206 = vld [vmem:[%s176 + $0x8] sm:$0xff]
        %v207 = vmul.f32 %v203, %v203
        %v208 = vmul.f32 %v204, %v204
        %209 = vadd.xlane.f32.xlu0 %v207
        %v210 = vpop.xlane.xlu0 %209
        %211 = vadd.xlane.f32.xlu0 %v208
        %v212 = vpop.xlane.xlu0 %211
        %v213 = vmax.f32 %v210, 1e-24
        %v214 = vmax.f32 %v212, 1e-24
        %v215 = vrsqrt.pop %v213
        %v216 = vrsqrt.pop %v214
        %v217 = vmul.f32 %v215, 100.0
        %v218 = vmul.f32 %v216, 100.0
        %v219 = vmul.f32 %v203, %v217
        %v220 = vmul.f32 %v204, %v218
        %221 = vmax.xlane.f32.xlu0 %v219
        %v222 = vpop.xlane.xlu0 %221
        %223 = vmax.xlane.f32.xlu0 %v220
        %v224 = vpop.xlane.xlu0 %223
        %v225 = vsub.f32 %v219, %v222
        %v226 = vsub.f32 %v220, %v224
        %v227 = vmul.f32 %v225, 1.442695
        %v228 = vpow.pop %v227
        %v229 = vmul.f32 %v226, 1.442695
        %v230 = vpow.pop %v229
        %231 = vadd.xlane.f32.xlu0 %v228
        %v232 = vpop.xlane.xlu0 %231
        %233 = vadd.xlane.f32.xlu0 %v230
        %v234 = vpop.xlane.xlu0 %233
        %v235 = vlog2.pop %v232
        %v236 = vmul.f32 %v235, 0.6931472
        %v237 = vlog2.pop %v234
        %v238 = vmul.f32 %v237, 0.6931472
        %v239 = vsub.f32 %v225, %v236
        %v240 = vsub.f32 %v226, %v238
        %v241 = vsub.f32 %v232, %v228
        %v242 = vsub.f32 %v234, %v230
        %v243 = vmax.f32 %v241, 0.0
        %v244 = vmax.f32 %v242, 0.0
        %v245 = vlog2.pop %v243
        %v246 = vmul.f32 %v245, 0.6931472
        %v247 = vlog2.pop %v244
        %v248 = vmul.f32 %v247, 0.6931472
        %v249 = vsub.f32 %v246, %v236
        %v250 = vsub.f32 %v248, %v238
        %v251 = vmax.f32 %v239, -100.0
        %v252 = vmax.f32 %v240, -100.0
        %v253 = vmax.f32 %v249, -100.0
        %v254 = vmax.f32 %v250, -100.0
        %v255 = vsub.f32 %v251, %v253
        %v256 = vsub.f32 %v252, %v254
        %v257 = vmul.f32 %v205, %v255
        %v258 = vmul.f32 %v206, %v256
        %v259 = vadd.f32 %v253, %v257
        %v260 = vadd.f32 %v254, %v258
        %v261 = vsub.f32 0.0, %v259
        %v262 = vsub.f32 0.0, %v260
        %s263 = smul.u32 %s22, 16
        %v264 = vlaneseq
        %v265 = vand.u32 %v264, 127
        %v266 = vstv %s263
        %v267 = vadd.s32 %v266, %v265
        %vm268 = vcmp.lt.s32.totalorder %v267, 64
        %v269 = vsel %vm268, 1, 0
        %v270 = vcvt.s32.f32 %v269
        %vm271 = vcmask 130048
        %v273 = vsel %vm271, %v270, 0
        %275 = vmatprep.subr.mxu0 0.0
        %276 = vmatpush1.msra.mxu0 %v261
        %277 = vmatprep.subr.mxu0 0.0
        %278 = vmatpush1.msra.mxu0 %v262
        %279 = vmatprep.subr.mxu0 0.0
        %280 = vmatpush1.msra.mxu0 0.0
        %281 = vmatprep.subr.mxu0 0.0
        %282 = vmatpush1.msra.mxu0 0.0
        %283 = vmatprep.subr.mxu0 0.0
        %284 = vmatpush1.msra.mxu0 0.0
        %285 = vmatprep.subr.mxu0 0.0
        %286 = vmatpush1.msra.mxu0 0.0
        %287 = vmatprep.subr.mxu0 0.0
        %288 = vmatpush1.msra.mxu0 0.0
        %289 = vmatprep.subr.mxu0 0.0
        %290 = vmatpush1.msra.mxu0 0.0
        %291 = vmatprep.subr.mxu0 0.0
        %292 = vmatpush1.msra.mxu0 0.0
        %293 = vmatprep.subr.mxu0 0.0
        %294 = vmatpush1.msra.mxu0 0.0
        %295 = vmatprep.subr.mxu0 0.0
        %296 = vmatpush1.msra.mxu0 0.0
        %297 = vmatprep.subr.mxu0 0.0
        %298 = vmatpush1.msra.mxu0 0.0
        %299 = vmatprep.subr.mxu0 0.0
        %300 = vmatpush1.msra.mxu0 0.0
        %301 = vmatprep.subr.mxu0 0.0
        %302 = vmatpush1.msra.mxu0 0.0
        %303 = vmatprep.subr.mxu0 0.0
        %304 = vmatpush1.msra.mxu0 0.0
        %305 = vmatprep.subr.mxu0 0.0
        %306 = vmatpush1.msra.mxu0 0.0
        %307 = vmatprep.subr.mxu0 0.0
        %308 = vmatpush1.msra.mxu0 0.0
        %309 = vmatprep.subr.mxu0 0.0
        %310 = vmatpush1.msra.mxu0 0.0
        %311 = vmatprep.subr.mxu0 0.0
        %312 = vmatpush1.msra.mxu0 0.0
        %313 = vmatprep.subr.mxu0 0.0
        %314 = vmatpush1.msra.mxu0 0.0
        %315 = vmatprep.subr.mxu0 0.0
        %316 = vmatpush1.msra.mxu0 0.0
        %317 = vmatprep.subr.mxu0 0.0
        %318 = vmatpush1.msra.mxu0 0.0
        %319 = vmatprep.subr.mxu0 0.0
        %320 = vmatpush1.msra.mxu0 0.0
        %321 = vmatprep.subr.mxu0 0.0
        %322 = vmatpush1.msra.mxu0 0.0
        %323 = vmatprep.subr.mxu0 0.0
        %324 = vmatpush1.msra.mxu0 0.0
        %325 = vmatprep.subr.mxu0 0.0
        %326 = vmatpush1.msra.mxu0 0.0
        %327 = vmatprep.subr.mxu0 0.0
        %328 = vmatpush1.msra.mxu0 0.0
        %329 = vmatprep.subr.mxu0 0.0
        %330 = vmatpush1.msra.mxu0 0.0
        %331 = vmatprep.subr.mxu0 0.0
        %332 = vmatpush1.msra.mxu0 0.0
        %333 = vmatprep.subr.mxu0 0.0
        %334 = vmatpush1.msra.mxu0 0.0
        %335 = vmatprep.subr.mxu0 0.0
        %336 = vmatpush1.msra.mxu0 0.0
        %337 = vmatprep.subr.mxu0 0.0
        %338 = vmatpush1.msra.mxu0 0.0
        %339 = vmatprep.mubr.f32.mxu0 0.0
        %340 = vmatmul.mubr.f32.gmra.mrb[0].mxu0 %v273
        %v341 = vpop.f32.mrb[0].mxu0
        %v342 = vadd.f32 0.0, %v341
        %v343 = vpop.f32.mrb[0].mxu0
        %344 = vdwg.mxu0
        %345 = vst [vmem:[%s200] sm:$0x1] %v342
        %s346 = sand.u32 %s82, 1
        %s347 = scalar_lea.sflag [#allocation4], %s346
        %s348 = sand.u32 %s82, 1
        %s349 = scalar_lea.vmem [#allocation7], %s348
        // Predicated region
        $region37: #{tpu_custom_call.1} parent=27 // pred_check
          %p350 = pneg %p92
        $region38: #{tpu_custom_call.1} parent=27 // pred_check_branch
          %352 = sbr.rel (%p350) target = $region40
        $region39: #{tpu_custom_call.1} parent=27 // pred_region
          %s354 = ssub.s32 16, 16
          %355 = vsyncadd %s347, %s354
          %s356 = smul.addr %s22, 16
          %s357 = scalar_lea.hbm %s2, %s356
          %s359 = sshll.u32 %s349, 4
          %s360 = int_to_ptr.vmem [resolvable:$true] %s359
          %362 = dma.vmem_to_hbm [thread:$0]  %s360, 16, %s357, %s347
        $region40: #{tpu_custom_call.1} parent=27 // pred_fallthru
          _
      $region28: #{tpu_custom_call.1} parent=5 // pred_fallthru
        _
      %p363 = scmp.le.s32.totalorder 2, %s17
      // Predicated region
      $region41: #{tpu_custom_call.1} parent=5 // pred_check
        %p364 = pneg %p363
      $region42: #{tpu_custom_call.1} parent=5 // pred_check_branch
        %366 = sbr.rel (%p364) target = $region44
      $region43: #{tpu_custom_call.1} parent=5 // pred_region
        %s367 = ssub.s32 %s17, 2
        // Predicated region
        $region45: #{tpu_custom_call.1} parent=43 // pred_check
          %p368 = pneg %p98
        $region46: #{tpu_custom_call.1} parent=43 // pred_check_branch
          %370 = sbr.rel (%p368) target = $region48
        $region47: #{tpu_custom_call.1} parent=43 // pred_region
          %s371 = sand.u32 %s83, 1
          %s372 = scalar_lea.sflag [#allocation4], %s371
          %s373 = sand.u32 %s83, 1
          %s374 = scalar_lea.vmem [#allocation7], %s373
          %375 = dma.done %s372, 16
        $region48: #{tpu_custom_call.1} parent=43 // pred_fallthru
          _
      $region44: #{tpu_custom_call.1} parent=5 // pred_fallthru
        _
    $region6: #{tpu_custom_call.1} parent=1 // loop_footer
      %s21 = sadd.s32 1, %s17
    $region7: #{tpu_custom_call.1} parent=1 // loop_footer_branch
      %16 = sbr.rel target = $region3
    $region8: #{tpu_custom_call.1} parent=1 // loop_exit
      _
    %376 = vsyncpa [#allocation3], 1
    %s377 = scalar_lea.sflag [#allocation3], 1
    %378 = vsyncpa %s377, 1
    %379 = vsyncpa [#allocation6], 1
    %s380 = scalar_lea.sflag [#allocation6], 1
    %381 = vsyncpa %s380, 1
    %382 = vsyncpa [#allocation4], 1
    %s383 = scalar_lea.sflag [#allocation4], 1
    %384 = vsyncpa %s383, 1

</llo_original>
